<compile_context>
chip_gen: v7x
topology: tpu7x:2x2x1
jax: 0.10.0
libtpu: 0.0.40
codegen_flags: <defaults>
</compile_context>

<pallas_src>
import functools

import numpy as np
import jax
import jax.numpy as jnp
from jax.experimental import pallas as pl
from jax.experimental.pallas import tpu as pltpu


_LANE = 128
_PACK_MAX_D_TILES = 16384        # keeps the packed 16-bit accumulator fields carry-free


def _round_up(x, m):
    return ((x + m - 1) // m) * m


def _sublane_granule(dtype):
    """Native second-minor granule: 8 rows for 32-bit, 16 for 16-bit, 32 for 8-bit."""
    return 8 * max(1, 4 // jnp.dtype(dtype).itemsize)


def _tile_budget_and_limit():
    """Per-chip VMEM tile budget (includes input double-buffering) + scoped-VMEM limit."""
    try:
        cap = int(pltpu.get_tpu_info().vmem_capacity_bytes)
    except Exception:                     # conservative default: v7x-sized VMEM
        cap = 64 * 1024 * 1024
    budget = max(4 * 1024 * 1024, min(cap // 3, 48 * 1024 * 1024))
    limit = min(int(cap * 0.85), budget + (16 << 20))
    return budget, limit


def _choose_rows(N, D, bytes_per_elem, row_granule, budget):
    """Pick the row tile, row-grid size and the per-row column budget."""
    max_elems = max(budget // max(bytes_per_elem, 1), row_granule * _LANE)
    d_ceil = _round_up(max(D, 1), _LANE)
    rows_fit = max(row_granule, max_elems // d_ceil)
    if N <= rows_fit:
        tile_n = N                                   # full leading dim -> no row masking
    else:
        tile_n = max(row_granule, (rows_fit // row_granule) * row_granule)
    n_tiles = pl.cdiv(N, tile_n)
    # v7x megacore: give the "parallel" axis >= 2 entries when the batch is splittable
    # (harmless extra row-tile boundary on single-core v5e/v6e).
    if n_tiles == 1 and N >= 2 * row_granule:
        tile_n = _round_up(-(-N // 2), row_granule)
        n_tiles = pl.cdiv(N, tile_n)
    per_row = max(_LANE, max_elems // max(tile_n, 1))
    cap_d = max(_LANE, (per_row // _LANE) * _LANE)
    return tile_n, n_tiles, cap_d, per_row


def _pick_tile_d_two_class(D, cap_d):
    """tile_d (multiple of 128) and the per-class width Dp (== D when no pad is needed)."""
    if D % _LANE == 0:
        q = D // _LANE
        lim = max(1, min(cap_d // _LANE, q))
        div = 1
        for cand in range(lim, 0, -1):
            if q % cand == 0:
                div = cand
                break
        tile_d = div * _LANE
        # Accept the divisor only if it is reasonably close to the budget cap;
        # otherwise a one-off pad of preds beats thousands of tiny grid steps.
        if 2 * tile_d >= min(cap_d, D):
            return tile_d, D
    tile_d = min(cap_d, _round_up(D, _LANE))
    return tile_d, _round_up(D, tile_d)


def _shifted_col_map(off):
    def index_map(i, j):
        return (i, j + off)
    return index_map


def _canonical_labels(labels2d):
    dt = labels2d.dtype
    if dt == jnp.bool_:
        return labels2d.astype(jnp.int32)
    if jnp.issubdtype(dt, jnp.integer):
        return labels2d.astype(jnp.int32) if dt.itemsize > 4 else labels2d
    if jnp.issubdtype(dt, jnp.floating):
        return labels2d.astype(jnp.float32) if dt.itemsize > 4 else labels2d
    return labels2d.astype(jnp.int32)


# ---------------------------------------------------------------------------
# Kernel
# ---------------------------------------------------------------------------

def _recall_kernel(*refs, two_class, packed, mask_rows, mask_cols,
                   n_valid, d_valid, tile_n, tile_d, ignore_idx,
                   logit_threshold):
    if two_class:
        labels_ref, p0_ref, p1_ref, out_ref = refs[:4]
        acc_refs = refs[4:]
    else:
        labels_ref, p1_ref, out_ref = refs[:3]
        p0_ref = None
        acc_refs = refs[3:]

    i = pl.program_id(0)
    j = pl.program_id(1)

    @pl.when(j == 0)
    def _init():
        for r in acc_refs:
            r[...] = jnp.zeros_like(r)

    labels = labels_ref[...]
    if jnp.issubdtype(labels.dtype, jnp.integer) and labels.dtype.itemsize < 4:
        labels = labels.astype(jnp.int32)        # clean 32-bit layout downstream

    trues = labels == 1
    if ignore_idx == 1:
        # weights = (labels != ignore_idx) only changes the result when it can zero out
        # a positive label, i.e. when ignore_idx == 1.
        trues = jnp.logical_and(trues, labels != ignore_idx)

    # Ragged boundary blocks (no HBM padding): mask garbage tails in-kernel.
    if mask_rows:
        row_ids = jax.lax.broadcasted_iota(jnp.int32, (tile_n, tile_d), 0)
        trues = jnp.logical_and(trues, row_ids + i * tile_n < n_valid)
    if mask_cols:
        col_ids = jax.lax.broadcasted_iota(jnp.int32, (tile_n, tile_d), 1)
        trues = jnp.logical_and(trues, col_ids + j * tile_d < d_valid)

    if two_class:
        # argmax over 2 classes; ties -> class 0 (matches torch.max index semantics)
        pred_true = p1_ref[...] > p0_ref[...]
    else:
        # sigmoid(x) > t  <=>  x > log(t/(1-t)); threshold folded to a constant.
        pred_true = p1_ref[...] > logit_threshold

    pos32 = trues.astype(jnp.int32)
    tp32 = jnp.logical_and(trues, pred_true).astype(jnp.int32)

    if packed:
        # positives in the low 16 bits, true-positives in the high 16 bits.
        acc_refs[0][...] += pos32 + (tp32 << 16)
    else:
        acc_refs[0][...] += tp32
        acc_refs[1][...] += pos32

    @pl.when(j == pl.num_programs(1) - 1)
    def _finalize():
        if packed:
            acc = acc_refs[0][...]
            tp = jnp.sum(acc >> 16)
            pos = jnp.sum(acc & 0xFFFF)
        else:
            tp = jnp.sum(acc_refs[0][...])
            pos = jnp.sum(acc_refs[1][...])
        out_ref[0, 0] = tp
        out_ref[0, 1] = pos - tp         # false negatives


# ---------------------------------------------------------------------------
# pallas_call wrapper
# ---------------------------------------------------------------------------

def _recall_counts(labels2d, preds_op, *, two_class, tile_n, tile_d, n_tiles,
                   d_tiles, d1_off, mask_rows, mask_cols, n_valid, d_valid,
                   packed, ignore_idx, logit_threshold, vmem_limit):
    block = (tile_n, tile_d)
    lbl_spec = pl.BlockSpec(block, lambda i, j: (i, j))
    out_spec = pl.BlockSpec((1, 2), lambda i, j: (i, 0),
                            memory_space=pltpu.MemorySpace.SMEM)
    scratch = [pltpu.VMEM(block, jnp.int32)]
    if not packed:
        scratch.append(pltpu.VMEM(block, jnp.int32))

    if two_class:
        in_specs = [lbl_spec,
                    pl.BlockSpec(block, lambda i, j: (i, j)),          # class-0 plane
                    pl.BlockSpec(block, _shifted_col_map(d1_off))]     # class-1 plane
        operands = (labels2d, preds_op, preds_op)
    else:
        in_specs = [lbl_spec, pl.BlockSpec(block, lambda i, j: (i, j))]
        operands = (labels2d, preds_op)

    kernel = functools.partial(
        _recall_kernel, two_class=two_class, packed=packed,
        mask_rows=mask_rows, mask_cols=mask_cols, n_valid=n_valid,
        d_valid=d_valid, tile_n=tile_n, tile_d=tile_d,
        ignore_idx=ignore_idx, logit_threshold=logit_threshold)

    partials = pl.pallas_call(
        kernel,
        out_shape=jax.ShapeDtypeStruct((n_tiles, 2), jnp.int32),
        grid_spec=pltpu.PrefetchScalarGridSpec(
            num_scalar_prefetch=0,
            grid=(n_tiles, d_tiles),
            in_specs=in_specs,
            out_specs=out_spec,
            scratch_shapes=scratch),
        compiler_params=pltpu.CompilerParams(
            dimension_semantics=("parallel", "arbitrary"),
            vmem_limit_bytes=vmem_limit),
    )(*operands)

    tp = jnp.sum(partials[:, 0]).astype(jnp.float32)
    fn = jnp.sum(partials[:, 1]).astype(jnp.float32)
    return tp, fn


# ---------------------------------------------------------------------------
# Module wrapper
# ---------------------------------------------------------------------------

class Recall:
    """JAX/Pallas port of the PyTorch Recall metric module (weights=None path)."""

    def __init__(self, dim=1, ignore_idx=-1, threshold=0.5):
        # buffers ("total", "count") registered at zero
        self.total = jnp.zeros((1,), jnp.float32)
        self.count = jnp.zeros((1,), jnp.float32)
        self._ignore_idx = ignore_idx
        self._dim = dim
        self._threshold = threshold

    def _logit_threshold(self):
        t = float(self._threshold)
        if t <= 0.0:
            return float("-inf")     # sigmoid(x) > 0 is True for every finite logit
        if t >= 1.0:
            return float("inf")      # sigmoid(x) > 1 is never True
        return float(np.log(t / (1.0 - t)))

    def forward(self, labels, preds, weights=None):
        if weights is not None:
            # TODO(synk): explicit user-provided weights path not wired into the kernel.
            raise NotImplementedError("only the weights=None path is implemented")

        if self._dim != 1:
            preds = jnp.moveaxis(preds, self._dim, 1)
        C = preds.shape[1]

        N = int(labels.shape[0])
        D = int(np.prod(labels.shape[1:])) if labels.ndim > 1 else 1

        labels2d = _canonical_labels(labels.reshape(N, D))
        budget, vmem_limit = _tile_budget_and_limit()
        two_class = C != 1

        if two_class:
            assert C == 2, 'precision only support 2 class'
            preds3 = preds.reshape(N, 2, D)
            if preds3.dtype.itemsize > 4:
                preds3 = preds3.astype(jnp.float32)
            pred_itemsize = preds3.dtype.itemsize
            pred_planes = 2
            pred_granule = _sublane_granule(preds3.dtype)
        else:
            p1 = preds.reshape(N, D)
            if (not jnp.issubdtype(p1.dtype, jnp.floating)) or p1.dtype.itemsize > 4:
                p1 = p1.astype(jnp.float32)
            pred_itemsize = p1.dtype.itemsize
            pred_planes = 1
            pred_granule = _sublane_granule(p1.dtype)

        row_granule = max(_sublane_granule(labels2d.dtype), pred_granule)
        # VMEM bytes per label element: double-buffered labels + pred plane(s)
        # + one int32 (packed) accumulator plane.
        bytes_per_elem = (2 * labels2d.dtype.itemsize
                          + 2 * pred_planes * pred_itemsize + 4)
        tile_n, n_tiles, cap_d, per_row = _choose_rows(
            N, D, bytes_per_elem, row_granule, budget)

        if two_class:
            tile_d, Dp = _pick_tile_d_two_class(D, cap_d)
            d_tiles = Dp // tile_d
            d1_off = d_tiles                    # block-column offset of class-1 plane
            if Dp != D:
                # Preds alone are padded, only when D is not lane-aligned.
                preds3 = jnp.pad(preds3, ((0, 0), (0, 0), (0, Dp - D)))
            preds_op = preds3.reshape(N, 2 * Dp)        # free reshape (contiguous)
        else:
            if D <= per_row:
                tile_d, d_tiles = D, 1          # full rows: no masking, no padding
            else:
                tile_d = cap_d
                d_tiles = pl.cdiv(D, tile_d)
            d1_off = 0
            preds_op = p1

        mask_rows = (N % tile_n) != 0
        mask_cols = (d_tiles * tile_d) != D
        packed = d_tiles <= _PACK_MAX_D_TILES

        tp, fn = _recall_counts(
            labels2d, preds_op, two_class=two_class, tile_n=tile_n,
            tile_d=tile_d, n_tiles=n_tiles, d_tiles=d_tiles, d1_off=d1_off,
            mask_rows=mask_rows, mask_cols=mask_cols, n_valid=N, d_valid=D,
            packed=packed, ignore_idx=self._ignore_idx,
            logit_threshold=self._logit_threshold(), vmem_limit=vmem_limit)

        cnt = tp + fn
        do_update = cnt > 0
        self.count = jnp.where(do_update, self.count + cnt, self.count)
        self.total = jnp.where(do_update, self.total + tp, self.total)
        return self.value

    @property
    def value(self):
        return self.total / self.count

    def clear(self):
        self.total = jnp.zeros((1,), jnp.float32)
        self.count = jnp.zeros((1,), jnp.float32)


# ---------------------------------------------------------------------------
# Reference + test
# ---------------------------------------------------------------------------

def _reference_recall(labels, preds, dim=1, ignore_idx=-1, threshold=0.5):
    """Pure-numpy reference mirroring the PyTorch forward (weights=None)."""
    labels = np.asarray(labels)
    preds = np.asarray(preds, dtype=np.float64)
    if preds.shape[dim] == 1:
        pred_labels = (1.0 / (1.0 + np.exp(-preds)) > threshold).astype(np.int64)
        pred_labels = np.squeeze(pred_labels, axis=dim)
    else:
        pred_labels = np.argmax(preds, axis=dim)
    N = labels.shape[0]
    l = labels.reshape(N, -1)
    p = pred_labels.reshape(N, -1)
    w = (l != ignore_idx).astype(np.float64)
    trues = l == 1
    tp = (w * (trues & (p == 1)).astype(np.float64)).sum()
    fn = (w * (trues & (p == 0)).astype(np.float64)).sum()
    return tp / (tp + fn)


if __name__ == "__main__":
    key = jax.random.PRNGKey(0)
    keys = jax.random.split(key, 10)

    def check(labels, preds, name):
        metric = Recall(dim=1, ignore_idx=-1, threshold=0.5)
        value = jax.block_until_ready(metric.forward(labels, preds))
        ref = _reference_recall(labels, preds)
        np.testing.assert_allclose(np.asarray(value)[0], ref,
                                   rtol=1e-6, atol=1e-6, err_msg=name)

    # 2-class, 128-aligned spatial size (no padding, no masking anywhere)
    labels = jax.random.randint(keys[0], (2, 16, 16), -1, 2, dtype=jnp.int32)
    preds = jax.random.normal(keys[1], (2, 2, 16, 16), dtype=jnp.float32)
    check(labels, preds, "two_class_aligned")

    # single-logit (sigmoid > threshold), 128-aligned
    labels = jax.random.randint(keys[2], (2, 16, 16), -1, 2, dtype=jnp.int32)
    preds = jax.random.normal(keys[3], (2, 1, 16, 16), dtype=jnp.float32)
    check(labels, preds, "single_logit_aligned")

    # 2-class, non-128-aligned spatial size (ragged-column masking, preds-only pad)
    labels = jax.random.randint(keys[4], (3, 10, 10), -1, 2, dtype=jnp.int32)
    preds = jax.random.normal(keys[5], (3, 2, 10, 10), dtype=jnp.float32)
    check(labels, preds, "two_class_ragged")

    # single-logit, non-128-aligned (full-row tile_d escape: no pad, no mask)
    labels = jax.random.randint(keys[6], (3, 10, 10), -1, 2, dtype=jnp.int32)
    preds = jax.random.normal(keys[7], (3, 1, 10, 10), dtype=jnp.float32)
    check(labels, preds, "single_logit_ragged")

    # int8 labels + enough rows to exercise the 32-row granule, row tiling,
    # the megacore row split and ragged row/column masking together.
    labels = jax.random.randint(keys[8], (70, 5, 7), -1, 2, dtype=jnp.int8)
    preds = jax.random.normal(keys[9], (70, 2, 5, 7), dtype=jnp.float32)
    check(labels, preds, "two_class_int8_rows")

    print("KERNEL_OK")
</pallas_src>

<mosaic_0001>
module attributes {stable_mosaic.version = 11 : i64} {
  func.func @_recall_kernel(%arg0: i32, %arg1: i32, %arg2: memref<2x256xi32, #tpu.memory_space<vmem>>, %arg3: memref<2x256xf32, #tpu.memory_space<vmem>>, %arg4: memref<2x256xf32, #tpu.memory_space<vmem>>, %arg5: memref<1x2xi32, #tpu.memory_space<smem>>, %arg6: memref<2x256xi32, #tpu.memory_space<vmem>>) attributes {dimension_semantics = [#tpu.dimension_semantics<parallel>, #tpu.dimension_semantics<arbitrary>], iteration_bounds = array<i64: 1, 1>, scalar_prefetch = 0 : i64, scratch_operands = 1 : i64, tpu.core_type = #tpu.core_type<tc>, window_params = [{transform_indices = @transform_0, window_bounds = array<i64: 2, 256>}, {transform_indices = @transform_1, window_bounds = array<i64: 2, 256>}, {transform_indices = @transform_2, window_bounds = array<i64: 2, 256>}, {transform_indices = @transform_3, window_bounds = array<i64: 1, 2>}]} {
    %c0_i32 = arith.constant 0 : i32
    %0 = arith.cmpi eq, %arg1, %c0_i32 : i32
    %1 = arith.extui %0 : i1 to i32
    %c0_i32_0 = arith.constant 0 : i32
    %2 = arith.cmpi ne, %1, %c0_i32_0 : i32
    scf.if %2 {
      %c0_i32_12 = arith.constant 0 : i32
      %21 = vector.broadcast %c0_i32_12 : i32 to vector<2x256xi32>
      %c0_13 = arith.constant 0 : index
      %c0_14 = arith.constant 0 : index
      %22 = vector.load %arg6[%c0_13, %c0_14] : memref<2x256xi32, #tpu.memory_space<vmem>>, vector<2x256xi32>
      tpu.vector_store %arg6[%c0_13, %c0_14], %21 {strides = array<i32>} : memref<2x256xi32, #tpu.memory_space<vmem>>, vector<2x256xi32>,
    } else {
    }
    %c0 = arith.constant 0 : index
    %c0_1 = arith.constant 0 : index
    %3 = vector.load %arg2[%c0, %c0_1] : memref<2x256xi32, #tpu.memory_space<vmem>>, vector<2x256xi32>
    %c1_i32 = arith.constant 1 : i32
    %4 = vector.broadcast %c1_i32 : i32 to vector<2x256xi32>
    %5 = arith.cmpi eq, %3, %4 : vector<2x256xi32>
    %c0_2 = arith.constant 0 : index
    %c0_3 = arith.constant 0 : index
    %6 = vector.load %arg4[%c0_2, %c0_3] : memref<2x256xf32, #tpu.memory_space<vmem>>, vector<2x256xf32>
    %c0_4 = arith.constant 0 : index
    %c0_5 = arith.constant 0 : index
    %7 = vector.load %arg3[%c0_4, %c0_5] : memref<2x256xf32, #tpu.memory_space<vmem>>, vector<2x256xf32>
    %8 = arith.cmpf ogt, %6, %7 : vector<2x256xf32>
    %9 = arith.extui %5 : vector<2x256xi1> to vector<2x256xi32>
    %10 = arith.andi %5, %8 : vector<2x256xi1>
    %11 = arith.extui %10 : vector<2x256xi1> to vector<2x256xi32>
    %c0_6 = arith.constant 0 : index
    %c0_7 = arith.constant 0 : index
    %12 = vector.load %arg6[%c0_6, %c0_7] : memref<2x256xi32, #tpu.memory_space<vmem>>, vector<2x256xi32>
    %c16_i32 = arith.constant 16 : i32
    %13 = vector.broadcast %c16_i32 : i32 to vector<2x256xi32>
    %14 = arith.shli %11, %13 : vector<2x256xi32>
    %15 = arith.addi %9, %14 : vector<2x256xi32>
    %16 = arith.addi %12, %15 : vector<2x256xi32>
    %c0_8 = arith.constant 0 : index
    %c0_9 = arith.constant 0 : index
    %17 = vector.load %arg6[%c0_8, %c0_9] : memref<2x256xi32, #tpu.memory_space<vmem>>, vector<2x256xi32>
    tpu.vector_store %arg6[%c0_8, %c0_9], %16 {strides = array<i32>} : memref<2x256xi32, #tpu.memory_space<vmem>>, vector<2x256xi32>,
    %c0_i32_10 = arith.constant 0 : i32
    %18 = arith.cmpi eq, %arg1, %c0_i32_10 : i32
    %19 = arith.extui %18 : i1 to i32
    %c0_i32_11 = arith.constant 0 : i32
    %20 = arith.cmpi ne, %19, %c0_i32_11 : i32
    scf.if %20 {
      %c0_12 = arith.constant 0 : index
      %c0_13 = arith.constant 0 : index
      %21 = vector.load %arg6[%c0_12, %c0_13] : memref<2x256xi32, #tpu.memory_space<vmem>>, vector<2x256xi32>
      %c16_i32_14 = arith.constant 16 : i32
      %22 = vector.broadcast %c16_i32_14 : i32 to vector<2x256xi32>
      %23 = arith.shrsi %21, %22 : vector<2x256xi32>
      %24 = vector.shape_cast %23 : vector<2x256xi32> to vector<1x2x256xi32>
      %cst = arith.constant dense<0> : vector<1xi32>
      %25 = vector.multi_reduction <add>, %24, %cst [1, 2] : vector<1x2x256xi32> to vector<1xi32>
      %26 = vector.shape_cast %25 : vector<1xi32> to vector<1x1x1xi32>
      %27 = vector.extract %26[0, 0, 0] : i32 from vector<1x1x1xi32>
      %c65535_i32 = arith.constant 65535 : i32
      %28 = vector.broadcast %c65535_i32 : i32 to vector<2x256xi32>
      %29 = arith.andi %21, %28 : vector<2x256xi32>
      %30 = vector.shape_cast %29 : vector<2x256xi32> to vector<1x2x256xi32>
      %cst_15 = arith.constant dense<0> : vector<1xi32>
      %31 = vector.multi_reduction <add>, %30, %cst_15 [1, 2] : vector<1x2x256xi32> to vector<1xi32>
      %32 = vector.shape_cast %31 : vector<1xi32> to vector<1x1x1xi32>
      %33 = vector.extract %32[0, 0, 0] : i32 from vector<1x1x1xi32>
      %c0_16 = arith.constant 0 : index
      %c0_17 = arith.constant 0 : index
      %34 = memref.load %arg5[%c0_16, %c0_17] : memref<1x2xi32, #tpu.memory_space<smem>>
      memref.store %27, %arg5[%c0_16, %c0_17] : memref<1x2xi32, #tpu.memory_space<smem>>
      %35 = arith.subi %33, %27 : i32
      %c0_18 = arith.constant 0 : index
      %c1 = arith.constant 1 : index
      %36 = memref.load %arg5[%c0_18, %c1] : memref<1x2xi32, #tpu.memory_space<smem>>
      memref.store %35, %arg5[%c0_18, %c1] : memref<1x2xi32, #tpu.memory_space<smem>>
    } else {
    }
    return
  }
  func.func @transform_0(%arg0: i32, %arg1: i32) -> (i32, i32) {
    %c0_i32 = arith.constant 0 : i32
    return %arg0, %arg1 : i32, i32
  }
  func.func @transform_1(%arg0: i32, %arg1: i32) -> (i32, i32) {
    %c0_i32 = arith.constant 0 : i32
    return %arg0, %arg1 : i32, i32
  }
  func.func @transform_2(%arg0: i32, %arg1: i32) -> (i32, i32) {
    %c1_i32 = arith.constant 1 : i32
    %0 = arith.addi %arg1, %c1_i32 : i32
    %c0_i32 = arith.constant 0 : i32
    return %arg0, %0 : i32, i32
  }
  func.func @transform_3(%arg0: i32, %arg1: i32) -> (i32, i32) {
    %c0_i32 = arith.constant 0 : i32
    %c0_i32_0 = arith.constant 0 : i32
    return %arg0, %c0_i32 : i32, i32
  }
}

</mosaic_0001>

<llo_original>
// kernel: tpu_custom_call.1
$region0: #{tpu_custom_call.1}
  #allocation0 [shape = 'u32[]', space=smem, size = 0x4, offset = 0x4, fixed_abs, tag = 'smem constant byte address 0x4 - core index']
  #allocation1 [shape = 'u32[144,128]{1,0:T(1,128)}', space=vmem, size = 0x12000, scoped, tag = 'internal scratch']
  #allocation2 [shape = 's32[2,256]{1,0:T(2,128)}', space=vmem, size = 0x800, scoped, tag = 'scratch operand']
  %s0 = inlined_call_operand.hbm [shape: s32[2,256], index: 0, kind: input, shape index: {}]
  %s1 = inlined_call_operand.hbm [shape: f32[2,512], index: 1, kind: input, shape index: {}]
  %s2 = inlined_call_operand.hbm [shape: f32[2,512], index: 2, kind: input, shape index: {}]
  %s3 = inlined_call_operand.hbm [shape: s32[1,2], index: 3, kind: output, shape index: {}]
  %s4 = sld [smem:[#allocation0]]
  $region42: #{tpu_custom_call.1} parent=0
    _
  %s6 = ssub.s32 1, %s4
  %s7 = scalar_select 0, %s6, %s4
  $region1: #{tpu_custom_call.1} parent=0
    #allocation3 [shape = 'u8[2048]{0}', space=vmem, size = 0x800, scoped, tag = 'input window, operand 0, single buffered']
    #allocation4 [shape = 's32[1]{0}', space=sflag, size = 0x4, scoped, tag = 'scoped memory for tpu_custom_call.1']
    #allocation5 [shape = 's32[1]{0}', space=sflag, size = 0x4, scoped, tag = 'scoped memory for tpu_custom_call.1']
    #allocation6 [shape = 'u8[2048]{0}', space=vmem, size = 0x800, scoped, tag = 'input window, operand 1, single buffered']
    #allocation7 [shape = 's32[1]{0}', space=sflag, size = 0x4, scoped, tag = 'scoped memory for tpu_custom_call.1']
    #allocation8 [shape = 'u8[2048]{0}', space=vmem, size = 0x800, scoped, tag = 'input window, operand 2, single buffered']
    #allocation9 [shape = 'u8[512]{0}', space=smem, size = 0x200, scoped, tag = 'output window, operand 0, single buffered']
    %8 = vsyncpa [#allocation4], 0
    %9 = vsyncpa [#allocation7], 0
    %10 = vsyncpa [#allocation5], 0
    // Predicated region
    $region2: #{tpu_custom_call.1} parent=1 // pred_check
      _
    $region3: #{tpu_custom_call.1} parent=1 // pred_check_branch
      %12 = sbr.rel (0) target = $region5
    $region4: #{tpu_custom_call.1} parent=1 // pred_region
      %s14 = ssub.s32 64, 64
      %15 = vsyncadd [#allocation4], %s14
      %s17 = sshll.u32 [#allocation3], 4
      %s18 = int_to_ptr.vmem [resolvable:$true] %s17
      %20 = dma.hbm_to_vmem [thread:$0]  %s0, 64, %s18, [#allocation4]
    $region5: #{tpu_custom_call.1} parent=1 // pred_fallthru
      _
    // Predicated region
    $region6: #{tpu_custom_call.1} parent=1 // pred_check
      _
    $region7: #{tpu_custom_call.1} parent=1 // pred_check_branch
      %22 = sbr.rel (0) target = $region9
    $region8: #{tpu_custom_call.1} parent=1 // pred_region
      %s24 = ssub.s32 64, 64
      %25 = vsyncadd [#allocation7], %s24
      %s27 = sshll.u32 [#allocation6], 4
      %s28 = int_to_ptr.vmem [resolvable:$true] %s27
      %30 = dma.hbm_to_vmem [thread:$0]  %s1, 64, %s28, [#allocation7]
    $region9: #{tpu_custom_call.1} parent=1 // pred_fallthru
      _
    // Predicated region
    $region10: #{tpu_custom_call.1} parent=1 // pred_check
      _
    $region11: #{tpu_custom_call.1} parent=1 // pred_check_branch
      %32 = sbr.rel (0) target = $region13
    $region12: #{tpu_custom_call.1} parent=1 // pred_region
      %s33 = sadd.s32 0, 1
      %s34 = smul.u32 2, %s33
      %s36 = ssub.s32 64, 64
      %37 = vsyncadd [#allocation7], %s36
      %s38 = smul.addr %s34, 32
      %s39 = scalar_lea.hbm %s2, %s38
      %s41 = sshll.u32 [#allocation8], 4
      %s42 = int_to_ptr.vmem [resolvable:$true] %s41
      %44 = dma.hbm_to_vmem [thread:$0]  %s39, 64, %s42, [#allocation7]
    $region13: #{tpu_custom_call.1} parent=1 // pred_fallthru
      _
    // Predicated region
    $region14: #{tpu_custom_call.1} parent=1 // pred_check
      _
    $region15: #{tpu_custom_call.1} parent=1 // pred_check_branch
      %46 = sbr.rel (0) target = $region17
    $region16: #{tpu_custom_call.1} parent=1 // pred_region
      %47 = dma.done [#allocation4], 64
    $region17: #{tpu_custom_call.1} parent=1 // pred_fallthru
      _
    // Predicated region
    $region18: #{tpu_custom_call.1} parent=1 // pred_check
      _
    $region19: #{tpu_custom_call.1} parent=1 // pred_check_branch
      %49 = sbr.rel (0) target = $region21
    $region20: #{tpu_custom_call.1} parent=1 // pred_region
      %50 = dma.done [#allocation7], 64
    $region21: #{tpu_custom_call.1} parent=1 // pred_fallthru
      _
    // Predicated region
    $region22: #{tpu_custom_call.1} parent=1 // pred_check
      _
    $region23: #{tpu_custom_call.1} parent=1 // pred_check_branch
      %52 = sbr.rel (0) target = $region25
    $region24: #{tpu_custom_call.1} parent=1 // pred_region
      %53 = dma.done [#allocation7], 64
    $region25: #{tpu_custom_call.1} parent=1 // pred_fallthru
      _
    %s54 = sadd.s32 0, 1
    %s55 = smul.u32 2, %s54
    %p56 = scmp.eq.s32.totalorder 0, 0
    // Predicated region
    $region26: #{tpu_custom_call.1} parent=1 // pred_check
      %p57 = pneg %p56
    $region27: #{tpu_custom_call.1} parent=1 // pred_check_branch
      %59 = sbr.rel (%p57) target = $region29
    $region28: #{tpu_custom_call.1} parent=1 // pred_region
      %60 = vst [vmem:[#allocation2] sm:$0xf] 0
    $region29: #{tpu_custom_call.1} parent=1 // pred_fallthru
      _
    %v61 = vld [vmem:[#allocation3] sm:$0xf]
    %vm62 = vcmp.eq.s32.totalorder %v61, 1
    %v63 = vld [vmem:[#allocation8] sm:$0xf]
    %v64 = vld [vmem:[#allocation6] sm:$0xf]
    %vm65 = vcmp.gt.f32.partialorder %v63, %v64
    %v66 = vsel %vm62, 1, 0
    %vm67 = vmand %vm62, %vm65
    %v68 = vsel %vm67, 1, 0
    %v69 = vld [vmem:[#allocation2] sm:$0xf]
    %v70 = vshll.u32 %v68, 16
    %v71 = vadd.s32 %v66, %v70
    %v72 = vadd.s32 %v69, %v71
    %73 = vst [vmem:[#allocation2] sm:$0xf] %v72
    // Predicated region
    $region30: #{tpu_custom_call.1} parent=1 // pred_check
      %p74 = pneg %p56
    $region31: #{tpu_custom_call.1} parent=1 // pred_check_branch
      %76 = sbr.rel (%p74) target = $region33
    $region32: #{tpu_custom_call.1} parent=1 // pred_region
      %v77 = vld [vmem:[#allocation2] sm:$0xf]
      %v78 = vshra.s32 %v77, 16
      %v80 = vunpack.c.l.s4 1983009808
      %v81 = vunpack.c.0.s8 %v80
      %v82 = vlaneseq
      %v83 = vshrl.u32 %v82, 7
      %v84 = vsub.s32 %v81, %v83
      %v85 = vrot.slane %v78, %v84
      %v86 = vcombine.high %v85, %v85
      %vm87 = vcmask 1041408
      %v88 = vsel %vm87, %v85, 0
      %v89 = vsel %vm87, %v86, 0
      %v90 = vadd.s32 %v88, %v89
      %v91 = vand.u32 %v90, 65535
      %v92 = vshrl.u32 %v90, 16
      %v93 = vcvt.s32.f32 %v91
      %v94 = vcvt.s32.f32 %v92
      %95 = vadd.xlane.f32.xlu0 %v93
      %v96 = vpop.xlane.xlu0 %95
      %97 = vadd.xlane.f32.xlu0 %v94
      %v98 = vpop.xlane.xlu0 %97
      %v99 = vcvt.f32.s32 %v96
      %v100 = vcvt.f32.s32 %v98
      %v101 = vshll.u32 %v100, 16
      %v102 = vadd.s32 %v101, %v99
      %v103 = vrot.slane %v102, 4
      %v104 = vadd.s32 %v102, %v103
      %v105 = vrot.slane %v104, 2
      %v106 = vadd.s32 %v104, %v105
      %v107 = vrot.slane %v106, 1
      %v108 = vadd.s32 %v106, %v107
      %s109 = vtos %v108
      %v110 = vand.u32 %v77, 65535
      %v112 = vunpack.c.l.s4 1983009808
      %v113 = vunpack.c.0.s8 %v112
      %v114 = vlaneseq
      %v115 = vshrl.u32 %v114, 7
      %v116 = vsub.s32 %v113, %v115
      %v117 = vrot.slane %v110, %v116
      %v118 = vcombine.high %v117, %v117
      %v119 = vsel %vm87, %v117, 0
      %v120 = vsel %vm87, %v118, 0
      %v121 = vadd.s32 %v119, %v120
      %v122 = vand.u32 %v121, 65535
      %v123 = vshrl.u32 %v121, 16
      %v124 = vcvt.s32.f32 %v122
      %v125 = vcvt.s32.f32 %v123
      %126 = vadd.xlane.f32.xlu0 %v124
      %v127 = vpop.xlane.xlu0 %126
      %128 = vadd.xlane.f32.xlu0 %v125
      %v129 = vpop.xlane.xlu0 %128
      %v130 = vcvt.f32.s32 %v127
      %v131 = vcvt.f32.s32 %v129
      %v132 = vshll.u32 %v131, 16
      %v133 = vadd.s32 %v132, %v130
      %v134 = vrot.slane %v133, 4
      %v135 = vadd.s32 %v133, %v134
      %v136 = vrot.slane %v135, 2
      %v137 = vadd.s32 %v135, %v136
      %v138 = vrot.slane %v137, 1
      %v139 = vadd.s32 %v137, %v138
      %s140 = vtos %v139
      %s141 = scalar_lea.smem [#allocation9], 0
      %142 = sst [smem:[%s141]] %s109
      %s143 = ssub.s32 %s140, %s109
      %s144 = scalar_lea.smem [#allocation9], 1
      %145 = sst [smem:[%s144]] %s143
    $region33: #{tpu_custom_call.1} parent=1 // pred_fallthru
      _
    // Predicated region
    $region34: #{tpu_custom_call.1} parent=1 // pred_check
      _
    $region35: #{tpu_custom_call.1} parent=1 // pred_check_branch
      %147 = sbr.rel (0) target = $region37
    $region36: #{tpu_custom_call.1} parent=1 // pred_region
      %s149 = ssub.s32 16, 16
      %150 = vsyncadd [#allocation5], %s149
      %153 = dma.smem_to_hbm [#allocation9], 16, %s3, [#allocation5]
    $region37: #{tpu_custom_call.1} parent=1 // pred_fallthru
      _
    // Predicated region
    $region38: #{tpu_custom_call.1} parent=1 // pred_check
      _
    $region39: #{tpu_custom_call.1} parent=1 // pred_check_branch
      %155 = sbr.rel (0) target = $region41
    $region40: #{tpu_custom_call.1} parent=1 // pred_region
      %156 = dma.done [#allocation5], 16
    $region41: #{tpu_custom_call.1} parent=1 // pred_fallthru
      _
    %157 = sfence
    %158 = vsyncpa [#allocation4], 1
    %159 = vsyncpa [#allocation7], 1
    %160 = vsyncpa [#allocation5], 1

</llo_original>
